<compile_context>
chip_gen: v5e
topology: v5e:2x2
jax: 0.10.0
libtpu: 0.0.40
codegen_flags: <defaults>
</compile_context>

<pallas_src>
import jax
import jax.numpy as jnp
from jax.experimental import pallas as pl
from jax.experimental.pallas import tpu as pltpu


_VMEM_SPEC = pl.BlockSpec(memory_space=pltpu.MemorySpace.VMEM)

_ROW_TILE = 256            # rows per grid step in the tiled (large-N) path
_UNGRIDDED_MAX_ROWS = 512  # at/below this many packed rows: single-shot, no grid


# ------------------------------------------------------------------ kernels

def _fuse_table_kernel(emb_ref, w1_ref, b1_ref, w2_ref, b2_ref, tblk_ref):
    """Once-per-parameter-set: T = relu(relu(E@W1+b1)@W2+b2), emitted as the
    lane-dense block-diagonal table blockdiag_P(T) of shape (P*V, P*D)."""
    v, d = emb_ref.shape
    p = tblk_ref.shape[0] // v

    t = jnp.dot(emb_ref[...], w1_ref[...],
                preferred_element_type=jnp.float32) + b1_ref[...]
    t = jnp.maximum(t, 0.0)
    t = jnp.dot(t, w2_ref[...],
                preferred_element_type=jnp.float32) + b2_ref[...]
    t = jnp.maximum(t, 0.0)                                    # (V, D)

    tblk_ref[...] = jnp.zeros_like(tblk_ref)
    for s in range(p):                                         # static unroll (prep-only)
        tblk_ref[s * v:(s + 1) * v, s * d:(s + 1) * d] = t


def _select_kernel(tgt_ref, tblk_ref, o_ref):
    """Hot path: lane-dense packed row-select, onehot(targets) @ T_blk.
    tgt:  (g, P*V) int32 target column ids (-1 => all-zero row)
    tblk: (P*V, P*D) f32 block-diagonal fused table
    out:  (g, P*D) f32 -- full 128-lane (or wider) stores."""
    col = jax.lax.broadcasted_iota(jnp.int32, tgt_ref.shape, 1)   # (g, P*V)
    onehot = (col == tgt_ref[...]).astype(jnp.float32)
    o_ref[...] = jnp.dot(onehot, tblk_ref[...],
                         preferred_element_type=jnp.float32).astype(o_ref.dtype)


# ------------------------------------------------------------------ wrappers

def fuse_params(params, pack=None):
    """Collapse embedding + both linears + ReLUs into one packed lookup table.
    Call once per parameter set; reuse the result for every forward."""
    emb = params["embedding"]
    V, D = emb.shape
    # tokens packed per output row; 128//D keeps every store lane-dense.
    P = pack if pack is not None else max(1, 128 // D)

    t_blk = pl.pallas_call(
        _fuse_table_kernel,
        out_shape=jax.ShapeDtypeStruct((P * V, P * D), jnp.float32),
        in_specs=[_VMEM_SPEC] * 5,
        out_specs=_VMEM_SPEC,
    )(emb, params["w1"], params["b1"], params["w2"], params["b2"])

    return dict(table_blk=t_blk, num_embeddings=V, embedding_dim=D, pack=P)


def integer_embedding_forward(x, fused):
    """x: (B, S) int32 indices -> (B, S, D) float32, using the fused table."""
    t_blk = fused["table_blk"]
    V, D, P = fused["num_embeddings"], fused["embedding_dim"], fused["pack"]
    PV, PD = P * V, P * D

    B, S = x.shape
    N = B * S
    G = pl.cdiv(N, P)          # packed rows
    n_pad = G * P

    # Lane-major target column ids: tgt[g, s*V + v] == s*V + idx[g*P + s].
    idx = x.reshape(-1).astype(jnp.int32)
    if n_pad != N:
        idx = jnp.pad(idx, (0, n_pad - N), constant_values=-1)
    idx2d = idx.reshape(G, P)
    offs = (jnp.arange(P, dtype=jnp.int32) * V)[None, :]
    valid = (idx2d >= 0) & (idx2d < V)          # OOB / padding -> zero rows
    tgt = jnp.where(valid, idx2d + offs, jnp.int32(-1))
    tgt = jnp.repeat(tgt, V, axis=1)            # (G, P*V)

    if G <= _UNGRIDDED_MAX_ROWS:
        # Single-shot: whole arrays in VMEM, no grid / pipeline machinery.
        out_packed = pl.pallas_call(
            _select_kernel,
            out_shape=jax.ShapeDtypeStruct((G, PD), jnp.float32),
            in_specs=[_VMEM_SPEC, _VMEM_SPEC],
            out_specs=_VMEM_SPEC,
        )(tgt, t_blk)
    else:
        # Large-N path: row-tiled grid, "parallel" so both v7x TCs are used;
        # the tiny table stays VMEM-resident (constant index_map).
        Gp = pl.cdiv(G, _ROW_TILE) * _ROW_TILE
        if Gp != G:
            tgt = jnp.pad(tgt, ((0, Gp - G), (0, 0)), constant_values=-1)
        out_packed = pl.pallas_call(
            _select_kernel,
            out_shape=jax.ShapeDtypeStruct((Gp, PD), jnp.float32),
            grid=(Gp // _ROW_TILE,),
            in_specs=[
                pl.BlockSpec((_ROW_TILE, PV), lambda i: (i, 0)),
                pl.BlockSpec((PV, PD), lambda i: (0, 0)),
            ],
            out_specs=pl.BlockSpec((_ROW_TILE, PD), lambda i: (i, 0)),
            compiler_params=pltpu.CompilerParams(
                dimension_semantics=("parallel",)),
        )(tgt, t_blk)
        out_packed = out_packed[:G]

    return out_packed.reshape(n_pad, D)[:N].reshape(B, S, D)


# ------------------------------------------------------------------ params

def init_params(key, num_embeddings, embedding_dim):
    k_emb, k_w1, k_b1, k_w2, k_b2 = jax.random.split(key, 5)
    bound = 1.0 / jnp.sqrt(embedding_dim)
    return dict(
        # nn.Embedding default: N(0, 1)
        embedding=jax.random.normal(k_emb, (num_embeddings, embedding_dim), jnp.float32),
        # nn.Linear default: U(-1/sqrt(fan_in), 1/sqrt(fan_in)); stored as W.T -> (in, out)
        w1=jax.random.uniform(k_w1, (embedding_dim, embedding_dim), jnp.float32, -bound, bound),
        b1=jax.random.uniform(k_b1, (1, embedding_dim), jnp.float32, -bound, bound),
        w2=jax.random.uniform(k_w2, (embedding_dim, embedding_dim), jnp.float32, -bound, bound),
        b2=jax.random.uniform(k_b2, (1, embedding_dim), jnp.float32, -bound, bound),
    )


# ------------------------------------------------------------------ main

if __name__ == "__main__":
    num_embeddings, embedding_dim = 16, 32
    batch, seq = 2, 8

    key = jax.random.PRNGKey(0)
    kp, kx, kx2 = jax.random.split(key, 3)

    params = init_params(kp, num_embeddings, embedding_dim)
    fused = jax.block_until_ready(fuse_params(params))   # once per parameter set

    # Pure-JAX reference (same math as the PyTorch forward).
    hi = jax.lax.Precision.HIGHEST

    def ref_forward(xi):
        h = params["embedding"][xi]
        h = jnp.maximum(jnp.matmul(h, params["w1"], precision=hi) + params["b1"], 0.0)
        h = jnp.maximum(jnp.matmul(h, params["w2"], precision=hi) + params["b2"], 0.0)
        return h

    # Small demo (un-gridded single-shot path).
    x = jax.random.randint(kx, (batch, seq), 0, num_embeddings, dtype=jnp.int32)
    out = jax.block_until_ready(integer_embedding_forward(x, fused))
    assert out.shape == (batch, seq, embedding_dim)
    assert bool(jnp.all(jnp.isfinite(out)))
    assert bool(jnp.allclose(out, ref_forward(x), atol=5e-3, rtol=5e-3))

    # Larger batch exercises the row-tiled "parallel" grid path.
    x2 = jax.random.randint(kx2, (32, 128), 0, num_embeddings, dtype=jnp.int32)
    out2 = jax.block_until_ready(integer_embedding_forward(x2, fused))
    assert bool(jnp.allclose(out2, ref_forward(x2), atol=5e-3, rtol=5e-3))

    print("KERNEL_OK")
</pallas_src>

<mosaic_0001>
module attributes {stable_mosaic.version = 11 : i64} {
  func.func @_fuse_table_kernel(%arg0: memref<16x32xf32, #tpu.memory_space<vmem>>, %arg1: memref<32x32xf32, #tpu.memory_space<vmem>>, %arg2: memref<1x32xf32, #tpu.memory_space<vmem>>, %arg3: memref<32x32xf32, #tpu.memory_space<vmem>>, %arg4: memref<1x32xf32, #tpu.memory_space<vmem>>, %arg5: memref<64x128xf32, #tpu.memory_space<vmem>>) attributes {dimension_semantics = [], scalar_prefetch = 0 : i64, scratch_operands = 0 : i64, tpu.core_type = #tpu.core_type<tc>} {
    %c0 = arith.constant 0 : index
    %c0_0 = arith.constant 0 : index
    %0 = vector.load %arg0[%c0, %c0_0] : memref<16x32xf32, #tpu.memory_space<vmem>>, vector<16x32xf32>
    %c0_1 = arith.constant 0 : index
    %c0_2 = arith.constant 0 : index
    %1 = vector.load %arg1[%c0_1, %c0_2] : memref<32x32xf32, #tpu.memory_space<vmem>>, vector<32x32xf32>
    %cst = arith.constant dense<0.000000e+00> : vector<16x32xf32>
    %2 = tpu.matmul %0, %1, %cst {dimension_numbers = #tpu.dot_dimension_numbers<[1], [0], [0], [1], [0, 0, 1, 1], [], []>} : vector<16x32xf32>, vector<32x32xf32>, vector<16x32xf32> -> vector<16x32xf32>
    %c0_3 = arith.constant 0 : index
    %c0_4 = arith.constant 0 : index
    %3 = vector.load %arg2[%c0_3, %c0_4] : memref<1x32xf32, #tpu.memory_space<vmem>>, vector<1x32xf32>
    %4 = vector.broadcast %3 : vector<1x32xf32> to vector<16x32xf32>
    %5 = arith.addf %2, %4 : vector<16x32xf32>
    %cst_5 = arith.constant 0.000000e+00 : f32
    %6 = vector.broadcast %cst_5 : f32 to vector<16x32xf32>
    %7 = arith.maximumf %5, %6 : vector<16x32xf32>
    %c0_6 = arith.constant 0 : index
    %c0_7 = arith.constant 0 : index
    %8 = vector.load %arg3[%c0_6, %c0_7] : memref<32x32xf32, #tpu.memory_space<vmem>>, vector<32x32xf32>
    %cst_8 = arith.constant dense<0.000000e+00> : vector<16x32xf32>
    %9 = tpu.matmul %7, %8, %cst_8 {dimension_numbers = #tpu.dot_dimension_numbers<[1], [0], [0], [1], [0, 0, 1, 1], [], []>} : vector<16x32xf32>, vector<32x32xf32>, vector<16x32xf32> -> vector<16x32xf32>
    %c0_9 = arith.constant 0 : index
    %c0_10 = arith.constant 0 : index
    %10 = vector.load %arg4[%c0_9, %c0_10] : memref<1x32xf32, #tpu.memory_space<vmem>>, vector<1x32xf32>
    %11 = vector.broadcast %10 : vector<1x32xf32> to vector<16x32xf32>
    %12 = arith.addf %9, %11 : vector<16x32xf32>
    %cst_11 = arith.constant 0.000000e+00 : f32
    %13 = vector.broadcast %cst_11 : f32 to vector<16x32xf32>
    %14 = arith.maximumf %12, %13 : vector<16x32xf32>
    %cst_12 = arith.constant 0.000000e+00 : f32
    %15 = vector.broadcast %cst_12 : f32 to vector<64x128xf32>
    %c0_13 = arith.constant 0 : index
    %c0_14 = arith.constant 0 : index
    %16 = vector.load %arg5[%c0_13, %c0_14] : memref<64x128xf32, #tpu.memory_space<vmem>>, vector<64x128xf32>
    tpu.vector_store %arg5[%c0_13, %c0_14], %15 {strides = array<i32>} : memref<64x128xf32, #tpu.memory_space<vmem>>, vector<64x128xf32>,
    %c0_15 = arith.constant 0 : index
    %c0_16 = arith.constant 0 : index
    %17 = vector.load %arg5[%c0_15, %c0_16] : memref<64x128xf32, #tpu.memory_space<vmem>>, vector<16x32xf32>
    tpu.vector_store %arg5[%c0_15, %c0_16], %14 {strides = array<i32>} : memref<64x128xf32, #tpu.memory_space<vmem>>, vector<16x32xf32>,
    %c16 = arith.constant 16 : index
    %c32 = arith.constant 32 : index
    %18 = vector.load %arg5[%c16, %c32] : memref<64x128xf32, #tpu.memory_space<vmem>>, vector<16x32xf32>
    tpu.vector_store %arg5[%c16, %c32], %14 {strides = array<i32>} : memref<64x128xf32, #tpu.memory_space<vmem>>, vector<16x32xf32>,
    %c32_17 = arith.constant 32 : index
    %c64 = arith.constant 64 : index
    %19 = vector.load %arg5[%c32_17, %c64] : memref<64x128xf32, #tpu.memory_space<vmem>>, vector<16x32xf32>
    tpu.vector_store %arg5[%c32_17, %c64], %14 {strides = array<i32>} : memref<64x128xf32, #tpu.memory_space<vmem>>, vector<16x32xf32>,
    %c48 = arith.constant 48 : index
    %c96 = arith.constant 96 : index
    %20 = vector.load %arg5[%c48, %c96] : memref<64x128xf32, #tpu.memory_space<vmem>>, vector<16x32xf32>
    tpu.vector_store %arg5[%c48, %c96], %14 {strides = array<i32>} : memref<64x128xf32, #tpu.memory_space<vmem>>, vector<16x32xf32>,
    return
  }
}

</mosaic_0001>

<llo_original>
// kernel: tpu_custom_call.1
$region0: #{tpu_custom_call.1}
  #allocation0 [shape = 'u32[]', space=smem, size = 0x4, offset = 0x4, fixed_abs, tag = 'smem constant byte address 0x4 - core index']
  #allocation1 [shape = 'u32[72,128]{1,0:T(1,128)}', space=vmem, size = 0x9000, scoped, tag = 'internal scratch']
  %s0 = inlined_call_operand.hbm [shape: f32[16,32], index: 0, kind: input, shape index: {}]
  %s1 = inlined_call_operand.hbm [shape: f32[32,32], index: 1, kind: input, shape index: {}]
  %s2 = inlined_call_operand.vmem [shape: f32[1,32], index: 2, kind: input, shape index: {}]
  %s3 = inlined_call_operand.hbm [shape: f32[32,32], index: 3, kind: input, shape index: {}]
  %s4 = inlined_call_operand.vmem [shape: f32[1,32], index: 4, kind: input, shape index: {}]
  %s5 = inlined_call_operand.hbm [shape: f32[64,128], index: 5, kind: output, shape index: {}]
  %s6 = sld [smem:[#allocation0]]
  $region42: #{tpu_custom_call.1} parent=0
    _
  %s8 = ssub.s32 1, %s6
  %s9 = scalar_select 0, %s8, %s6
  $region1: #{tpu_custom_call.1} parent=0
    #allocation2 [shape = 'u8[8192]{0}', space=vmem, size = 0x2000, scoped, tag = 'input window, operand 0, single buffered']
    #allocation3 [shape = 's32[1]{0}', space=sflag, size = 0x4, scoped, tag = 'scoped memory for tpu_custom_call.1']
    #allocation4 [shape = 's32[1]{0}', space=sflag, size = 0x4, scoped, tag = 'scoped memory for tpu_custom_call.1']
    #allocation5 [shape = 'u8[16384]{0}', space=vmem, size = 0x4000, scoped, tag = 'input window, operand 1, single buffered']
    #allocation6 [shape = 's32[1]{0}', space=sflag, size = 0x4, scoped, tag = 'scoped memory for tpu_custom_call.1']
    #allocation7 [shape = 'u8[16384]{0}', space=vmem, size = 0x4000, scoped, tag = 'input window, operand 3, single buffered']
    #allocation8 [shape = 'u8[32768]{0}', space=vmem, size = 0x8000, scoped, tag = 'output window, operand 0, single buffered']
    %10 = vsyncpa [#allocation3], 0
    %11 = vsyncpa [#allocation6], 0
    %12 = vsyncpa [#allocation4], 0
    // Predicated region
    $region2: #{tpu_custom_call.1} parent=1 // pred_check
      _
    $region3: #{tpu_custom_call.1} parent=1 // pred_check_branch
      %14 = sbr.rel (0) target = $region5
    $region4: #{tpu_custom_call.1} parent=1 // pred_region
      %16 = vsyncadd [#allocation3], 0
      %s17 = sshll.u32 %s0, 4
      %s18 = int_to_ptr.hbm [resolvable:$true] %s17
      %s19 = sshll.u32 [#allocation2], 4
      %s20 = int_to_ptr.vmem [resolvable:$true] %s19
      %25 = dma.hbm_to_vmem [thread:$0]  %s18, 256, %s20, [#allocation3], 128, 128, 8
    $region5: #{tpu_custom_call.1} parent=1 // pred_fallthru
      _
    // Predicated region
    $region6: #{tpu_custom_call.1} parent=1 // pred_check
      _
    $region7: #{tpu_custom_call.1} parent=1 // pred_check_branch
      %27 = sbr.rel (0) target = $region9
    $region8: #{tpu_custom_call.1} parent=1 // pred_region
      %29 = vsyncadd [#allocation6], 0
      %s30 = sshll.u32 %s1, 4
      %s31 = int_to_ptr.hbm [resolvable:$true] %s30
      %s32 = sshll.u32 [#allocation5], 4
      %s33 = int_to_ptr.vmem [resolvable:$true] %s32
      %38 = dma.hbm_to_vmem [thread:$0]  %s31, 512, %s33, [#allocation6], 128, 128, 8
    $region9: #{tpu_custom_call.1} parent=1 // pred_fallthru
      _
    // Predicated region
    $region10: #{tpu_custom_call.1} parent=1 // pred_check
      _
    $region11: #{tpu_custom_call.1} parent=1 // pred_check_branch
      %40 = sbr.rel (0) target = $region13
    $region12: #{tpu_custom_call.1} parent=1 // pred_region
      _
    $region13: #{tpu_custom_call.1} parent=1 // pred_fallthru
      _
    // Predicated region
    $region14: #{tpu_custom_call.1} parent=1 // pred_check
      _
    $region15: #{tpu_custom_call.1} parent=1 // pred_check_branch
      %42 = sbr.rel (0) target = $region17
    $region16: #{tpu_custom_call.1} parent=1 // pred_region
      %44 = vsyncadd [#allocation6], 0
      %s45 = sshll.u32 %s3, 4
      %s46 = int_to_ptr.hbm [resolvable:$true] %s45
      %s47 = sshll.u32 [#allocation7], 4
      %s48 = int_to_ptr.vmem [resolvable:$true] %s47
      %53 = dma.hbm_to_vmem [thread:$0]  %s46, 512, %s48, [#allocation6], 128, 128, 8
    $region17: #{tpu_custom_call.1} parent=1 // pred_fallthru
      _
    // Predicated region
    $region18: #{tpu_custom_call.1} parent=1 // pred_check
      _
    $region19: #{tpu_custom_call.1} parent=1 // pred_check_branch
      %55 = sbr.rel (0) target = $region21
    $region20: #{tpu_custom_call.1} parent=1 // pred_region
      _
    $region21: #{tpu_custom_call.1} parent=1 // pred_fallthru
      _
    // Predicated region
    $region22: #{tpu_custom_call.1} parent=1 // pred_check
      _
    $region23: #{tpu_custom_call.1} parent=1 // pred_check_branch
      %57 = sbr.rel (0) target = $region25
    $region24: #{tpu_custom_call.1} parent=1 // pred_region
      %59 = dma.done [#allocation3], 256
    $region25: #{tpu_custom_call.1} parent=1 // pred_fallthru
      _
    // Predicated region
    $region26: #{tpu_custom_call.1} parent=1 // pred_check
      _
    $region27: #{tpu_custom_call.1} parent=1 // pred_check_branch
      %61 = sbr.rel (0) target = $region29
    $region28: #{tpu_custom_call.1} parent=1 // pred_region
      %63 = dma.done [#allocation6], 512
    $region29: #{tpu_custom_call.1} parent=1 // pred_fallthru
      _
    // Predicated region
    $region30: #{tpu_custom_call.1} parent=1 // pred_check
      _
    $region31: #{tpu_custom_call.1} parent=1 // pred_check_branch
      %65 = sbr.rel (0) target = $region33
    $region32: #{tpu_custom_call.1} parent=1 // pred_region
      %67 = dma.done [#allocation6], 512
    $region33: #{tpu_custom_call.1} parent=1 // pred_fallthru
      _
    %v68 = vld [vmem:[#allocation2] sm:$0xff]
    %v69 = vld [vmem:[#allocation2 + $0x8] sm:$0xff]
    %v70 = vld [vmem:[#allocation5] sm:$0xff]
    %v71 = vld [vmem:[#allocation5 + $0x8] sm:$0xff]
    %v72 = vld [vmem:[#allocation5 + $0x10] sm:$0xff]
    %v73 = vld [vmem:[#allocation5 + $0x18] sm:$0xff]
    %v74 = vld [vmem:[%s2] sm:$0x1]
    %v76 = vperm.slane %v74, 0
    %vm78 = vcmask 261120
    %v80 = vsel %vm78, %v68, 0
    %v83 = vsel %vm78, %v69, 0
    %85 = vmatpush.msra.mxu0 0.0
    %86 = vmatpush.msra.mxu0 0.0
    %87 = vmatpush.msra.mxu0 0.0
    %88 = vmatpush.msra.mxu0 0.0
    %89 = vmatpush.msra.mxu0 0.0
    %90 = vmatpush.msra.mxu0 0.0
    %91 = vmatpush.msra.mxu0 0.0
    %92 = vmatpush.msra.mxu0 0.0
    %93 = vmatpush.msra.mxu0 0.0
    %94 = vmatpush.msra.mxu0 0.0
    %95 = vmatpush.msra.mxu0 0.0
    %96 = vmatpush.msra.mxu0 0.0
    %97 = vmatpush.msra.mxu0 %v73
    %98 = vmatpush.msra.mxu0 %v72
    %99 = vmatpush.msra.mxu0 %v71
    %100 = vmatpush.msra.mxu0 %v70
    %101 = vmatmul.f32.gmra.mxu0 %v80
    %v102 = vpop.f32.mrf.mxu0
    %v103 = vadd.f32 %v76, %v102
    %104 = vmatmul.f32.gmra.mxu0 %v83
    %v105 = vpop.f32.mrf.mxu0
    %v106 = vadd.f32 %v76, %v105
    %107 = vdwg.mxu0
    %v108 = vmax.f32 %v103, 0.0
    %v109 = vmax.f32 %v106, 0.0
    %v110 = vld [vmem:[#allocation7] sm:$0xff]
    %v111 = vld [vmem:[#allocation7 + $0x8] sm:$0xff]
    %v112 = vld [vmem:[#allocation7 + $0x10] sm:$0xff]
    %v113 = vld [vmem:[#allocation7 + $0x18] sm:$0xff]
    %v114 = vld [vmem:[%s4] sm:$0x1]
    %v116 = vperm.slane %v114, 0
    %v119 = vsel %vm78, %v108, 0
    %v122 = vsel %vm78, %v109, 0
    %124 = vmatpush.msra.mxu0 0.0
    %125 = vmatpush.msra.mxu0 0.0
    %126 = vmatpush.msra.mxu0 0.0
    %127 = vmatpush.msra.mxu0 0.0
    %128 = vmatpush.msra.mxu0 0.0
    %129 = vmatpush.msra.mxu0 0.0
    %130 = vmatpush.msra.mxu0 0.0
    %131 = vmatpush.msra.mxu0 0.0
    %132 = vmatpush.msra.mxu0 0.0
    %133 = vmatpush.msra.mxu0 0.0
    %134 = vmatpush.msra.mxu0 0.0
    %135 = vmatpush.msra.mxu0 0.0
    %136 = vmatpush.msra.mxu0 %v113
    %137 = vmatpush.msra.mxu0 %v112
    %138 = vmatpush.msra.mxu0 %v111
    %139 = vmatpush.msra.mxu0 %v110
    %140 = vmatmul.f32.gmra.mxu0 %v119
    %v141 = vpop.f32.mrf.mxu0
    %v142 = vadd.f32 %v116, %v141
    %143 = vmatmul.f32.gmra.mxu0 %v122
    %v144 = vpop.f32.mrf.mxu0
    %v145 = vadd.f32 %v116, %v144
    %146 = vdwg.mxu0
    %v147 = vmax.f32 %v142, 0.0
    %v148 = vmax.f32 %v145, 0.0
    %149 = vst [vmem:[#allocation8] sm:$0xff] 0.0
    %150 = vst [vmem:[#allocation8 + $0x8] sm:$0xff] 0.0
    %151 = vst [vmem:[#allocation8 + $0x10] sm:$0xff] 0.0
    %152 = vst [vmem:[#allocation8 + $0x18] sm:$0xff] 0.0
    %153 = vst [vmem:[#allocation8 + $0x20] sm:$0xff] 0.0
    %154 = vst [vmem:[#allocation8 + $0x28] sm:$0xff] 0.0
    %155 = vst [vmem:[#allocation8 + $0x30] sm:$0xff] 0.0
    %156 = vst [vmem:[#allocation8 + $0x38] sm:$0xff] 0.0
    %157 = vst.msk [vmem:[#allocation8] sm:$0xff] %vm78, %v147
    %158 = vst.msk [vmem:[#allocation8 + $0x8] sm:$0xff] %vm78, %v148
    %161 = vrot.lane.b32.xlu0 %v147, 32
    %v162 = vpop.permute.xlu0 %161
    %163 = vrot.lane.b32.xlu0 %v148, 32
    %v164 = vpop.permute.xlu0 %163
    %vm167 = vcmask 523520
    %168 = vst.msk [vmem:[#allocation8 + $0x10] sm:$0xff] %vm167, %v162
    %169 = vst.msk [vmem:[#allocation8 + $0x18] sm:$0xff] %vm167, %v164
    %170 = vrot.lane.b32.xlu0 %v147, 64
    %v171 = vpop.permute.xlu0 %170
    %172 = vrot.lane.b32.xlu0 %v148, 64
    %v173 = vpop.permute.xlu0 %172
    %vm176 = vcmask 785920
    %177 = vst.msk [vmem:[#allocation8 + $0x20] sm:$0xff] %vm176, %v171
    %178 = vst.msk [vmem:[#allocation8 + $0x28] sm:$0xff] %vm176, %v173
    %179 = vrot.lane.b32.xlu0 %v147, 96
    %v180 = vpop.permute.xlu0 %179
    %181 = vrot.lane.b32.xlu0 %v148, 96
    %v182 = vpop.permute.xlu0 %181
    %vm185 = vcmask 1048320
    %186 = vst.msk [vmem:[#allocation8 + $0x30] sm:$0xff] %vm185, %v180
    %187 = vst.msk [vmem:[#allocation8 + $0x38] sm:$0xff] %vm185, %v182
    // Predicated region
    $region34: #{tpu_custom_call.1} parent=1 // pred_check
      _
    $region35: #{tpu_custom_call.1} parent=1 // pred_check_branch
      %189 = sbr.rel (0) target = $region37
    $region36: #{tpu_custom_call.1} parent=1 // pred_region
      %191 = vsyncadd [#allocation4], 0
      %s192 = sshll.u32 [#allocation8], 4
      %s193 = int_to_ptr.vmem [resolvable:$true] %s192
      %s194 = sshll.u32 %s5, 4
      %s195 = int_to_ptr.hbm [resolvable:$true] %s194
      %200 = dma.vmem_to_hbm [thread:$0]  %s193, 1024, %s195, [#allocation4], 128, 128, 8
    $region37: #{tpu_custom_call.1} parent=1 // pred_fallthru
      _
    // Predicated region
    $region38: #{tpu_custom_call.1} parent=1 // pred_check
      _
    $region39: #{tpu_custom_call.1} parent=1 // pred_check_branch
      %202 = sbr.rel (0) target = $region41
    $region40: #{tpu_custom_call.1} parent=1 // pred_region
      %204 = dma.done [#allocation4], 1024
    $region41: #{tpu_custom_call.1} parent=1 // pred_fallthru
      _
    %205 = vsyncpa [#allocation3], 1
    %206 = vsyncpa [#allocation6], 1
    %207 = vsyncpa [#allocation4], 1

</llo_original>
